<compile_context>
chip_gen: v7x
topology: tpu7x:2x2x1
jax: 0.10.0
libtpu: 0.0.40
codegen_flags: <defaults>
</compile_context>

<pallas_src>
import jax
import jax.numpy as jnp
from jax import lax
from jax.experimental import pallas as pl
from jax.experimental.pallas import tpu as pltpu


def _round_up(x, n):
    return ((x + n - 1) // n) * n


def nnlm_kernel(ids_ref, c_ref, hw_ref, d_ref, u_ref, b_ref, out_ref):
    tb, n_step = ids_ref.shape            # batch tile, context length
    n_class, m = c_ref.shape              # vocab, embedding dim
    n_hidden_p = d_ref.shape[1]           # padded hidden (multiple of 128)
    cdt = c_ref.dtype                     # matmul operand dtype (f32 or bf16)

    ids = ids_ref[...]                    # (tb, n_step) int32
    C = c_ref[...]                        # (n_class, m)
    col = lax.broadcasted_iota(jnp.int32, (tb, n_class), 1)

    # acc = X @ [H | W], accumulated per context step; X is never materialized.
    acc = jnp.zeros((tb, hw_ref.shape[1]), jnp.float32)
    for s in range(n_step):               # n_step is small & static -> unrolled
        onehot = (col == ids[:, s:s + 1]).astype(cdt)                  # (tb, n_class)
        x_s = jnp.dot(onehot, C, preferred_element_type=jnp.float32)   # gather row s
        acc = acc + jnp.dot(x_s.astype(cdt), hw_ref[pl.ds(s * m, m), :],
                            preferred_element_type=jnp.float32)        # (tb, Hp+Cp)

    hid = acc[:, :n_hidden_p]             # 128-aligned lane slices of the fused result
    xw = acc[:, n_hidden_p:]
    tanh = jnp.tanh(d_ref[...] + hid)     # f32 elementwise (EUP tanh)
    out = (b_ref[...] + xw
           + jnp.dot(tanh.astype(u_ref.dtype), u_ref[...],
                     preferred_element_type=jnp.float32))
    out_ref[...] = out.astype(out_ref.dtype)


def nnlm_forward(x_ids, C_emb, H_w, d, U_w, W_w, b, *, block_b=8, use_bf16=False):
    """x_ids: (batch, n_step) int32 token ids.
    H_w: (n_step*m, n_hidden), U_w: (n_hidden, n_class), W_w: (n_step*m, n_class)
    (i.e. already transposed vs torch Linear, so the kernel computes X @ W)."""
    batch, n_step = x_ids.shape
    n_class, m = C_emb.shape
    n_hidden = H_w.shape[1]

    n_class_p = _round_up(n_class, 128)
    n_hidden_p = _round_up(n_hidden, 128)
    batch_p = _round_up(batch, block_b)

    ids = x_ids.astype(jnp.int32)
    if batch_p != batch:
        ids = jnp.pad(ids, ((0, batch_p - batch), (0, 0)))   # pad rows use id 0

    # Fused, lane-padded [H | W]: (n_step*m, n_hidden_p + n_class_p).
    HW = jnp.zeros((n_step * m, n_hidden_p + n_class_p), jnp.float32)
    HW = HW.at[:, :n_hidden].set(H_w)
    HW = HW.at[:, n_hidden_p:n_hidden_p + n_class].set(W_w)

    U_p = jnp.zeros((n_hidden_p, n_class_p), jnp.float32).at[:n_hidden, :n_class].set(U_w)
    d_p = jnp.zeros((1, n_hidden_p), jnp.float32).at[:, :n_hidden].set(d)
    b_p = jnp.zeros((1, n_class_p), jnp.float32).at[:, :n_class].set(b)

    # Optional bf16 matmul operands (f32 accumulate inside the kernel).
    cdt = jnp.bfloat16 if use_bf16 else jnp.float32
    C_k = C_emb.astype(cdt)
    HW_k = HW.astype(cdt)
    U_k = U_p.astype(cdt)

    grid = (batch_p // block_b,)
    isz = jnp.dtype(cdt).itemsize
    flops = batch_p * (n_step * 2 * n_class * m
                       + 2 * (n_step * m) * (n_hidden_p + n_class_p)
                       + 2 * n_hidden_p * n_class_p)
    bytes_accessed = (ids.size * 4
                      + (C_k.size + HW_k.size + U_k.size) * isz
                      + (d_p.size + b_p.size) * 4
                      + batch_p * n_class_p * 4)

    out_p = pl.pallas_call(
        nnlm_kernel,
        out_shape=jax.ShapeDtypeStruct((batch_p, n_class_p), jnp.float32),
        grid=grid,
        in_specs=[
            pl.BlockSpec((block_b, n_step), lambda i: (i, 0)),                    # token ids
            pl.BlockSpec((n_class, m), lambda i: (0, 0)),                         # embedding C
            pl.BlockSpec((n_step * m, n_hidden_p + n_class_p), lambda i: (0, 0)),  # [H | W]
            pl.BlockSpec((1, n_hidden_p), lambda i: (0, 0)),                      # d
            pl.BlockSpec((n_hidden_p, n_class_p), lambda i: (0, 0)),              # U
            pl.BlockSpec((1, n_class_p), lambda i: (0, 0)),                       # b
        ],
        out_specs=pl.BlockSpec((block_b, n_class_p), lambda i: (i, 0)),
        compiler_params=pltpu.CompilerParams(
            dimension_semantics=("parallel",)),
        cost_estimate=pl.CostEstimate(
            flops=int(flops),
            transcendentals=int(batch_p * n_hidden_p),
            bytes_accessed=int(bytes_accessed)),
    )(ids, C_k, HW_k, d_p, U_k, b_p)

    # TODO(synk): at realistic vocab sizes (10k-100k), additionally tile n_class
    # (second grid axis over [H|W]/U/b/out columns) instead of keeping them fully
    # resident; re-derive tile sizes for v7x's 64 MiB VMEM.
    return out_p[:batch, :n_class]


def reference_forward(x_ids, C_emb, H_w, d, U_w, W_w, b):
    X = jnp.take(C_emb, x_ids, axis=0).reshape(x_ids.shape[0], -1)
    tanh = jnp.tanh(d[None, :] + X @ H_w)
    return b[None, :] + X @ W_w + tanh @ U_w


if __name__ == "__main__":
    # Small shapes consistent with the module.
    n_class = 64    # vocabulary size
    m = 8           # embedding dim
    n_step = 4      # context length
    n_hidden = 32
    batch = 16      # two batch tiles -> exercises the grid

    key = jax.random.PRNGKey(0)
    k_ids, k_C, k_H, k_U, k_W = jax.random.split(key, 5)

    C_emb = jax.random.normal(k_C, (n_class, m), dtype=jnp.float32)
    # Torch Linear stores (out, in) and computes x @ W.T; we store the transpose.
    H_w = jax.random.normal(k_H, (n_step * m, n_hidden), dtype=jnp.float32) * 0.1
    U_w = jax.random.normal(k_U, (n_hidden, n_class), dtype=jnp.float32) * 0.1
    W_w = jax.random.normal(k_W, (n_step * m, n_class), dtype=jnp.float32) * 0.1
    d = jnp.ones((n_hidden,), dtype=jnp.float32)     # nn.Parameter(torch.ones(n_hidden))
    b = jnp.ones((n_class,), dtype=jnp.float32)      # nn.Parameter(torch.ones(n_class))

    x_ids = jax.random.randint(k_ids, (batch, n_step), 0, n_class, dtype=jnp.int32)

    ref = reference_forward(x_ids, C_emb, H_w, d, U_w, W_w, b)

    # f32 path: should match the reference tightly.
    out = nnlm_forward(x_ids, C_emb, H_w, d, U_w, W_w, b)
    out = jax.block_until_ready(out)
    assert out.shape == (batch, n_class)
    assert jnp.allclose(out, ref, atol=1e-4, rtol=1e-4)

    # bf16 matmul-operand path (v6e/v7x MXU): f32 accumulate, f32 tanh/bias adds.
    out_bf16 = nnlm_forward(x_ids, C_emb, H_w, d, U_w, W_w, b, use_bf16=True)
    out_bf16 = jax.block_until_ready(out_bf16)
    assert out_bf16.shape == (batch, n_class)
    assert jnp.allclose(out_bf16, ref, atol=2e-1, rtol=2e-1)

    print("KERNEL_OK")
</pallas_src>

<mosaic_0001>
module attributes {stable_mosaic.version = 11 : i64} {
  func.func @nnlm_kernel(%arg0: i32, %arg1: memref<8x4xi32, #tpu.memory_space<vmem>>, %arg2: memref<64x8xf32, #tpu.memory_space<vmem>>, %arg3: memref<32x256xf32, #tpu.memory_space<vmem>>, %arg4: memref<1x128xf32, #tpu.memory_space<vmem>>, %arg5: memref<128x128xf32, #tpu.memory_space<vmem>>, %arg6: memref<1x128xf32, #tpu.memory_space<vmem>>, %arg7: memref<8x128xf32, #tpu.memory_space<vmem>>) attributes {dimension_semantics = [#tpu.dimension_semantics<parallel>], iteration_bounds = array<i64: 2>, scalar_prefetch = 0 : i64, scratch_operands = 0 : i64, tpu.core_type = #tpu.core_type<tc>, window_params = [{transform_indices = @transform_0, window_bounds = array<i64: 8, 4>}, {pipeline_mode = #tpu.pipeline_mode<synchronous>, transform_indices = @transform_1, window_bounds = array<i64: 64, 8>}, {pipeline_mode = #tpu.pipeline_mode<synchronous>, transform_indices = @transform_2, window_bounds = array<i64: 32, 256>}, {pipeline_mode = #tpu.pipeline_mode<synchronous>, transform_indices = @transform_3, window_bounds = array<i64: 1, 128>}, {pipeline_mode = #tpu.pipeline_mode<synchronous>, transform_indices = @transform_4, window_bounds = array<i64: 128, 128>}, {pipeline_mode = #tpu.pipeline_mode<synchronous>, transform_indices = @transform_5, window_bounds = array<i64: 1, 128>}, {transform_indices = @transform_6, window_bounds = array<i64: 8, 128>}]} {
    %c0 = arith.constant 0 : index
    %c0_0 = arith.constant 0 : index
    %0 = vector.load %arg1[%c0, %c0_0] : memref<8x4xi32, #tpu.memory_space<vmem>>, vector<8x4xi32>
    %c0_1 = arith.constant 0 : index
    %c0_2 = arith.constant 0 : index
    %1 = vector.load %arg2[%c0_1, %c0_2] : memref<64x8xf32, #tpu.memory_space<vmem>>, vector<64x8xf32>
    %2 = tpu.iota {dimensions = array<i32: 1>} : vector<8x64xi32>
    %cst = arith.constant 0.000000e+00 : f32
    %3 = vector.broadcast %cst : f32 to vector<8x256xf32>
    %4 = vector.extract_strided_slice %0 {offsets = [0, 0], sizes = [8, 1], strides = [1, 1]} : vector<8x4xi32> to vector<8x1xi32>
    %5 = vector.broadcast %4 : vector<8x1xi32> to vector<8x64xi32>
    %6 = arith.cmpi eq, %2, %5 : vector<8x64xi32>
    %7 = arith.extui %6 : vector<8x64xi1> to vector<8x64xi32>
    %8 = arith.sitofp %7 : vector<8x64xi32> to vector<8x64xf32>
    %cst_3 = arith.constant dense<0.000000e+00> : vector<8x8xf32>
    %9 = tpu.matmul %8, %1, %cst_3 {dimension_numbers = #tpu.dot_dimension_numbers<[1], [0], [0], [1], [0, 0, 1, 1], [], []>} : vector<8x64xf32>, vector<64x8xf32>, vector<8x8xf32> -> vector<8x8xf32>
    %c0_4 = arith.constant 0 : index
    %c0_5 = arith.constant 0 : index
    %10 = vector.load %arg3[%c0_4, %c0_5] : memref<32x256xf32, #tpu.memory_space<vmem>>, vector<8x256xf32>
    %cst_6 = arith.constant dense<0.000000e+00> : vector<8x256xf32>
    %11 = tpu.matmul %9, %10, %cst_6 {dimension_numbers = #tpu.dot_dimension_numbers<[1], [0], [0], [1], [0, 0, 1, 1], [], []>} : vector<8x8xf32>, vector<8x256xf32>, vector<8x256xf32> -> vector<8x256xf32>
    %12 = arith.addf %3, %11 : vector<8x256xf32>
    %13 = vector.extract_strided_slice %0 {offsets = [0, 1], sizes = [8, 1], strides = [1, 1]} : vector<8x4xi32> to vector<8x1xi32>
    %14 = vector.broadcast %13 : vector<8x1xi32> to vector<8x64xi32>
    %15 = arith.cmpi eq, %2, %14 : vector<8x64xi32>
    %16 = arith.extui %15 : vector<8x64xi1> to vector<8x64xi32>
    %17 = arith.sitofp %16 : vector<8x64xi32> to vector<8x64xf32>
    %cst_7 = arith.constant dense<0.000000e+00> : vector<8x8xf32>
    %18 = tpu.matmul %17, %1, %cst_7 {dimension_numbers = #tpu.dot_dimension_numbers<[1], [0], [0], [1], [0, 0, 1, 1], [], []>} : vector<8x64xf32>, vector<64x8xf32>, vector<8x8xf32> -> vector<8x8xf32>
    %c8 = arith.constant 8 : index
    %c0_8 = arith.constant 0 : index
    %19 = vector.load %arg3[%c8, %c0_8] : memref<32x256xf32, #tpu.memory_space<vmem>>, vector<8x256xf32>
    %cst_9 = arith.constant dense<0.000000e+00> : vector<8x256xf32>
    %20 = tpu.matmul %18, %19, %cst_9 {dimension_numbers = #tpu.dot_dimension_numbers<[1], [0], [0], [1], [0, 0, 1, 1], [], []>} : vector<8x8xf32>, vector<8x256xf32>, vector<8x256xf32> -> vector<8x256xf32>
    %21 = arith.addf %12, %20 : vector<8x256xf32>
    %22 = vector.extract_strided_slice %0 {offsets = [0, 2], sizes = [8, 1], strides = [1, 1]} : vector<8x4xi32> to vector<8x1xi32>
    %23 = vector.broadcast %22 : vector<8x1xi32> to vector<8x64xi32>
    %24 = arith.cmpi eq, %2, %23 : vector<8x64xi32>
    %25 = arith.extui %24 : vector<8x64xi1> to vector<8x64xi32>
    %26 = arith.sitofp %25 : vector<8x64xi32> to vector<8x64xf32>
    %cst_10 = arith.constant dense<0.000000e+00> : vector<8x8xf32>
    %27 = tpu.matmul %26, %1, %cst_10 {dimension_numbers = #tpu.dot_dimension_numbers<[1], [0], [0], [1], [0, 0, 1, 1], [], []>} : vector<8x64xf32>, vector<64x8xf32>, vector<8x8xf32> -> vector<8x8xf32>
    %c16 = arith.constant 16 : index
    %c0_11 = arith.constant 0 : index
    %28 = vector.load %arg3[%c16, %c0_11] : memref<32x256xf32, #tpu.memory_space<vmem>>, vector<8x256xf32>
    %cst_12 = arith.constant dense<0.000000e+00> : vector<8x256xf32>
    %29 = tpu.matmul %27, %28, %cst_12 {dimension_numbers = #tpu.dot_dimension_numbers<[1], [0], [0], [1], [0, 0, 1, 1], [], []>} : vector<8x8xf32>, vector<8x256xf32>, vector<8x256xf32> -> vector<8x256xf32>
    %30 = arith.addf %21, %29 : vector<8x256xf32>
    %31 = vector.extract_strided_slice %0 {offsets = [0, 3], sizes = [8, 1], strides = [1, 1]} : vector<8x4xi32> to vector<8x1xi32>
    %32 = vector.broadcast %31 : vector<8x1xi32> to vector<8x64xi32>
    %33 = arith.cmpi eq, %2, %32 : vector<8x64xi32>
    %34 = arith.extui %33 : vector<8x64xi1> to vector<8x64xi32>
    %35 = arith.sitofp %34 : vector<8x64xi32> to vector<8x64xf32>
    %cst_13 = arith.constant dense<0.000000e+00> : vector<8x8xf32>
    %36 = tpu.matmul %35, %1, %cst_13 {dimension_numbers = #tpu.dot_dimension_numbers<[1], [0], [0], [1], [0, 0, 1, 1], [], []>} : vector<8x64xf32>, vector<64x8xf32>, vector<8x8xf32> -> vector<8x8xf32>
    %c24 = arith.constant 24 : index
    %c0_14 = arith.constant 0 : index
    %37 = vector.load %arg3[%c24, %c0_14] : memref<32x256xf32, #tpu.memory_space<vmem>>, vector<8x256xf32>
    %cst_15 = arith.constant dense<0.000000e+00> : vector<8x256xf32>
    %38 = tpu.matmul %36, %37, %cst_15 {dimension_numbers = #tpu.dot_dimension_numbers<[1], [0], [0], [1], [0, 0, 1, 1], [], []>} : vector<8x8xf32>, vector<8x256xf32>, vector<8x256xf32> -> vector<8x256xf32>
    %39 = arith.addf %30, %38 : vector<8x256xf32>
    %40 = vector.extract_strided_slice %39 {offsets = [0, 0], sizes = [8, 128], strides = [1, 1]} : vector<8x256xf32> to vector<8x128xf32>
    %41 = vector.extract_strided_slice %39 {offsets = [0, 128], sizes = [8, 128], strides = [1, 1]} : vector<8x256xf32> to vector<8x128xf32>
    %c0_16 = arith.constant 0 : index
    %c0_17 = arith.constant 0 : index
    %42 = vector.load %arg4[%c0_16, %c0_17] : memref<1x128xf32, #tpu.memory_space<vmem>>, vector<1x128xf32>
    %43 = vector.broadcast %42 : vector<1x128xf32> to vector<8x128xf32>
    %44 = arith.addf %43, %40 : vector<8x128xf32>
    %45 = math.tanh %44 : vector<8x128xf32>
    %c0_18 = arith.constant 0 : index
    %c0_19 = arith.constant 0 : index
    %46 = vector.load %arg6[%c0_18, %c0_19] : memref<1x128xf32, #tpu.memory_space<vmem>>, vector<1x128xf32>
    %47 = vector.broadcast %46 : vector<1x128xf32> to vector<8x128xf32>
    %48 = arith.addf %47, %41 : vector<8x128xf32>
    %c0_20 = arith.constant 0 : index
    %c0_21 = arith.constant 0 : index
    %49 = vector.load %arg5[%c0_20, %c0_21] : memref<128x128xf32, #tpu.memory_space<vmem>>, vector<128x128xf32>
    %cst_22 = arith.constant dense<0.000000e+00> : vector<8x128xf32>
    %50 = tpu.matmul %45, %49, %cst_22 {dimension_numbers = #tpu.dot_dimension_numbers<[1], [0], [0], [1], [0, 0, 1, 1], [], []>} : vector<8x128xf32>, vector<128x128xf32>, vector<8x128xf32> -> vector<8x128xf32>
    %51 = arith.addf %48, %50 : vector<8x128xf32>
    %c0_23 = arith.constant 0 : index
    %c0_24 = arith.constant 0 : index
    %52 = vector.load %arg7[%c0_23, %c0_24] : memref<8x128xf32, #tpu.memory_space<vmem>>, vector<8x128xf32>
    tpu.vector_store %arg7[%c0_23, %c0_24], %51 {strides = array<i32>} : memref<8x128xf32, #tpu.memory_space<vmem>>, vector<8x128xf32>,
    return
  }
  func.func @transform_0(%arg0: i32) -> (i32, i32) {
    %c0_i32 = arith.constant 0 : i32
    %c0_i32_0 = arith.constant 0 : i32
    return %arg0, %c0_i32 : i32, i32
  }
  func.func @transform_1(%arg0: i32) -> (i32, i32) {
    %c0_i32 = arith.constant 0 : i32
    %c0_i32_0 = arith.constant 0 : i32
    %c0_i32_1 = arith.constant 0 : i32
    return %c0_i32, %c0_i32_0 : i32, i32
  }
  func.func @transform_2(%arg0: i32) -> (i32, i32) {
    %c0_i32 = arith.constant 0 : i32
    %c0_i32_0 = arith.constant 0 : i32
    %c0_i32_1 = arith.constant 0 : i32
    return %c0_i32, %c0_i32_0 : i32, i32
  }
  func.func @transform_3(%arg0: i32) -> (i32, i32) {
    %c0_i32 = arith.constant 0 : i32
    %c0_i32_0 = arith.constant 0 : i32
    %c0_i32_1 = arith.constant 0 : i32
    return %c0_i32, %c0_i32_0 : i32, i32
  }
  func.func @transform_4(%arg0: i32) -> (i32, i32) {
    %c0_i32 = arith.constant 0 : i32
    %c0_i32_0 = arith.constant 0 : i32
    %c0_i32_1 = arith.constant 0 : i32
    return %c0_i32, %c0_i32_0 : i32, i32
  }
  func.func @transform_5(%arg0: i32) -> (i32, i32) {
    %c0_i32 = arith.constant 0 : i32
    %c0_i32_0 = arith.constant 0 : i32
    %c0_i32_1 = arith.constant 0 : i32
    return %c0_i32, %c0_i32_0 : i32, i32
  }
  func.func @transform_6(%arg0: i32) -> (i32, i32) {
    %c0_i32 = arith.constant 0 : i32
    %c0_i32_0 = arith.constant 0 : i32
    return %arg0, %c0_i32 : i32, i32
  }
}

</mosaic_0001>

<llo_original>
// kernel: tpu_custom_call.1
$region0: #{tpu_custom_call.1}
  #allocation0 [shape = 'u32[]', space=smem, size = 0x4, offset = 0x4, fixed_abs, tag = 'smem constant byte address 0x4 - core index']
  #allocation1 [shape = 'u32[144,128]{1,0:T(1,128)}', space=vmem, size = 0x12000, scoped, tag = 'internal scratch']
  %s0 = inlined_call_operand.vmem [shape: s32[16,4], index: 0, kind: input, shape index: {}]
  %s1 = inlined_call_operand.vmem [shape: f32[64,8], index: 1, kind: input, shape index: {}]
  %s2 = inlined_call_operand.vmem [shape: f32[32,256], index: 2, kind: input, shape index: {}]
  %s3 = inlined_call_operand.vmem [shape: f32[1,128], index: 3, kind: input, shape index: {}]
  %s4 = inlined_call_operand.hbm [shape: f32[128,128], index: 4, kind: input, shape index: {}]
  %s5 = inlined_call_operand.vmem [shape: f32[1,128], index: 5, kind: input, shape index: {}]
  %s6 = inlined_call_operand.hbm [shape: f32[16,128], index: 6, kind: output, shape index: {}]
  %s7 = sld [smem:[#allocation0]]
  $region61: #{tpu_custom_call.1} parent=0
    _
  %s9 = ssub.s32 1, %s7
  %s10 = scalar_select 0, %s9, %s7
  $region1: #{tpu_custom_call.1} parent=0
    #allocation2 [shape = 'u8[65536]{0}', space=vmem, size = 0x10000, scoped, tag = 'input window, operand 4, single buffered']
    #allocation3 [shape = 's32[2]{0}', space=sflag, size = 0x8, scoped, tag = 'scoped memory for tpu_custom_call.1']
    #allocation4 [shape = 's32[2]{0}', space=sflag, size = 0x8, scoped, tag = 'scoped memory for tpu_custom_call.1']
    #allocation5 [shape = 'u8[8192]{0}', space=vmem, size = 0x2000, scoped, tag = 'output window, operand 0']
    %11 = vsyncpa [#allocation3], 0
    %12 = vsyncpa [#allocation4], 0
    %s13 = scalar_lea.sflag [#allocation4], 1
    %14 = vsyncpa %s13, 0
    loop: start=0, step=1, limit=4
    $region2: #{tpu_custom_call.1} parent=1 // loop_pre_header
      _
    $region3: #{tpu_custom_call.1} parent=1 // loop_header
      %s16 = sphi 0, %s20
      %p17 = scmp.ge.s32.totalorder %s16, 4
      %s26 = sphi 0, %s28
      %s29 = sphi 0, %s26
      %s30 = sphi 0, %s29
      %s46 = sphi 0, %s30
      %s50 = sphi 0, %s50
      %s52 = sphi 0, %s50
      %s53 = sphi 0, %s52
      %s67 = sphi 0, %s53
      %s71 = sphi 0, %s71
      %s73 = sphi 0, %s71
      %s74 = sphi 0, %s73
      %s88 = sphi 0, %s74
      %s92 = sphi 0, %s92
      %s94 = sphi 0, %s92
      %s95 = sphi 0, %s94
      %s109 = sphi 0, %s95
      %s113 = sphi 0, %s113
      %s115 = sphi 0, %s113
      %s116 = sphi 0, %s115
      %s130 = sphi 0, %s116
      %s134 = sphi 0, %s134
      %s136 = sphi 0, %s134
      %s137 = sphi 0, %s136
      %s151 = sphi 0, %s137
      %s157 = sphi 0, %s159
      %s160 = sphi 0, %s157
      %s161 = sphi 0, %s160
      %s177 = sphi 0, %s161
    $region4: #{tpu_custom_call.1} parent=1 // loop_header_branch
      %19 = sbr.rel (%p17) target = $region8
    $region5: #{tpu_custom_call.1} parent=1 // loop_body
      %s21 = ssub.s32 %s16, 1
      %s22 = ssub.s32 %s16, 2
      %s23 = sadd.s32 %s16, 1
      %s24 = ssub.s32 %s16, %s23
      %p25 = scmp.eq.s32.totalorder %s24, 0
      %s27 = sadd.s32 %s26, 1
      %s28 = scalar_select %p25, %s26, %s27
      %p31 = pneg %p25
      %p32 = scmp.eq.s32.totalorder %s16, 1
      %p33 = por %p31, %p32
      %p34 = scmp.ne.s32.totalorder %s26, %s29
      %p35 = scmp.eq.s32.totalorder %s16, 0
      %p36 = por %p34, %p35
      %p37 = scmp.ne.s32.totalorder %s26, %s29
      %p38 = scmp.eq.s32.totalorder %s21, 1
      %p39 = por %p37, %p38
      %p40 = scmp.ne.s32.totalorder %s29, %s30
      %p41 = scmp.eq.s32.totalorder %s21, 0
      %p42 = por %p40, %p41
      %p43 = scmp.ne.s32.totalorder %s29, %s30
      %p44 = scmp.eq.s32.totalorder %s22, 1
      %p45 = por %p43, %p44
      %p47 = scmp.ne.s32.totalorder %s30, %s46
      %p48 = scmp.eq.s32.totalorder %s22, 0
      %p49 = por %p47, %p48
      %s51 = sadd.s32 %s50, 1
      %p54 = scmp.eq.s32.totalorder %s16, 1
      %p55 = scmp.ne.s32.totalorder %s50, %s52
      %p56 = scmp.eq.s32.totalorder %s16, 0
      %p57 = por %p55, %p56
      %p58 = scmp.ne.s32.totalorder %s50, %s52
      %p59 = scmp.eq.s32.totalorder %s21, 1
      %p60 = por %p58, %p59
      %p61 = scmp.ne.s32.totalorder %s52, %s53
      %p62 = scmp.eq.s32.totalorder %s21, 0
      %p63 = por %p61, %p62
      %p64 = scmp.ne.s32.totalorder %s52, %s53
      %p65 = scmp.eq.s32.totalorder %s22, 1
      %p66 = por %p64, %p65
      %p68 = scmp.ne.s32.totalorder %s53, %s67
      %p69 = scmp.eq.s32.totalorder %s22, 0
      %p70 = por %p68, %p69
      %s72 = sadd.s32 %s71, 1
      %p75 = scmp.eq.s32.totalorder %s16, 1
      %p76 = scmp.ne.s32.totalorder %s71, %s73
      %p77 = scmp.eq.s32.totalorder %s16, 0
      %p78 = por %p76, %p77
      %p79 = scmp.ne.s32.totalorder %s71, %s73
      %p80 = scmp.eq.s32.totalorder %s21, 1
      %p81 = por %p79, %p80
      %p82 = scmp.ne.s32.totalorder %s73, %s74
      %p83 = scmp.eq.s32.totalorder %s21, 0
      %p84 = por %p82, %p83
      %p85 = scmp.ne.s32.totalorder %s73, %s74
      %p86 = scmp.eq.s32.totalorder %s22, 1
      %p87 = por %p85, %p86
      %p89 = scmp.ne.s32.totalorder %s74, %s88
      %p90 = scmp.eq.s32.totalorder %s22, 0
      %p91 = por %p89, %p90
      %s93 = sadd.s32 %s92, 1
      %p96 = scmp.eq.s32.totalorder %s16, 1
      %p97 = scmp.ne.s32.totalorder %s92, %s94
      %p98 = scmp.eq.s32.totalorder %s16, 0
      %p99 = por %p97, %p98
      %p100 = scmp.ne.s32.totalorder %s92, %s94
      %p101 = scmp.eq.s32.totalorder %s21, 1
      %p102 = por %p100, %p101
      %p103 = scmp.ne.s32.totalorder %s94, %s95
      %p104 = scmp.eq.s32.totalorder %s21, 0
      %p105 = por %p103, %p104
      %p106 = scmp.ne.s32.totalorder %s94, %s95
      %p107 = scmp.eq.s32.totalorder %s22, 1
      %p108 = por %p106, %p107
      %p110 = scmp.ne.s32.totalorder %s95, %s109
      %p111 = scmp.eq.s32.totalorder %s22, 0
      %p112 = por %p110, %p111
      %s114 = sadd.s32 %s113, 1
      %p117 = scmp.eq.s32.totalorder %s16, 1
      %p118 = scmp.ne.s32.totalorder %s113, %s115
      %p119 = scmp.eq.s32.totalorder %s16, 0
      %p120 = por %p118, %p119
      %p121 = scmp.ne.s32.totalorder %s113, %s115
      %p122 = scmp.eq.s32.totalorder %s21, 1
      %p123 = por %p121, %p122
      %p124 = scmp.ne.s32.totalorder %s115, %s116
      %p125 = scmp.eq.s32.totalorder %s21, 0
      %p126 = por %p124, %p125
      %p127 = scmp.ne.s32.totalorder %s115, %s116
      %p128 = scmp.eq.s32.totalorder %s22, 1
      %p129 = por %p127, %p128
      %p131 = scmp.ne.s32.totalorder %s116, %s130
      %p132 = scmp.eq.s32.totalorder %s22, 0
      %p133 = por %p131, %p132
      %s135 = sadd.s32 %s134, 1
      %p138 = scmp.eq.s32.totalorder %s16, 1
      %p139 = scmp.ne.s32.totalorder %s134, %s136
      %p140 = scmp.eq.s32.totalorder %s16, 0
      %p141 = por %p139, %p140
      %p142 = scmp.ne.s32.totalorder %s134, %s136
      %p143 = scmp.eq.s32.totalorder %s21, 1
      %p144 = por %p142, %p143
      %p145 = scmp.ne.s32.totalorder %s136, %s137
      %p146 = scmp.eq.s32.totalorder %s21, 0
      %p147 = por %p145, %p146
      %p148 = scmp.ne.s32.totalorder %s136, %s137
      %p149 = scmp.eq.s32.totalorder %s22, 1
      %p150 = por %p148, %p149
      %p152 = scmp.ne.s32.totalorder %s137, %s151
      %p153 = scmp.eq.s32.totalorder %s22, 0
      %p154 = por %p152, %p153
      %s155 = ssub.s32 %s16, %s23
      %p156 = scmp.eq.s32.totalorder %s155, 0
      %s158 = sadd.s32 %s157, 1
      %s159 = scalar_select %p156, %s157, %s158
      %p162 = pneg %p156
      %p163 = scmp.eq.s32.totalorder %s16, 1
      %p164 = por %p162, %p163
      %p165 = scmp.ne.s32.totalorder %s157, %s160
      %p166 = scmp.eq.s32.totalorder %s16, 0
      %p167 = por %p165, %p166
      %p168 = scmp.ne.s32.totalorder %s157, %s160
      %p169 = scmp.eq.s32.totalorder %s21, 1
      %p170 = por %p168, %p169
      %p171 = scmp.ne.s32.totalorder %s160, %s161
      %p172 = scmp.eq.s32.totalorder %s21, 0
      %p173 = por %p171, %p172
      %p174 = scmp.ne.s32.totalorder %s160, %s161
      %p175 = scmp.eq.s32.totalorder %s22, 1
      %p176 = por %p174, %p175
      %p178 = scmp.ne.s32.totalorder %s161, %s177
      %p179 = scmp.eq.s32.totalorder %s22, 0
      %p180 = por %p178, %p179
      %p181 = scmp.le.s32.totalorder 1, %s16
      %p182 = scmp.lt.s32.totalorder %s16, 3
      %p183 = pnand %p181, %p182
      %p184 = pneg %p183
      // Predicated region
      $region9: #{tpu_custom_call.1} parent=5 // pred_check
        _
      $region10: #{tpu_custom_call.1} parent=5 // pred_check_branch
        %186 = sbr.rel (%p183) target = $region12
      $region11: #{tpu_custom_call.1} parent=5 // pred_region
        %s187 = ssub.s32 %s16, 1
        // Predicated region
        $region13: #{tpu_custom_call.1} parent=11 // pred_check
          %p188 = pneg %p63
        $region14: #{tpu_custom_call.1} parent=11 // pred_check_branch
          %190 = sbr.rel (%p188) target = $region16
        $region15: #{tpu_custom_call.1} parent=11 // pred_region
          _
        $region16: #{tpu_custom_call.1} parent=11 // pred_fallthru
          _
        // Predicated region
        $region17: #{tpu_custom_call.1} parent=11 // pred_check
          %p191 = pneg %p84
        $region18: #{tpu_custom_call.1} parent=11 // pred_check_branch
          %193 = sbr.rel (%p191) target = $region20
        $region19: #{tpu_custom_call.1} parent=11 // pred_region
          _
        $region20: #{tpu_custom_call.1} parent=11 // pred_fallthru
          _
        // Predicated region
        $region21: #{tpu_custom_call.1} parent=11 // pred_check
          %p194 = pneg %p105
        $region22: #{tpu_custom_call.1} parent=11 // pred_check_branch
          %196 = sbr.rel (%p194) target = $region24
        $region23: #{tpu_custom_call.1} parent=11 // pred_region
          _
        $region24: #{tpu_custom_call.1} parent=11 // pred_fallthru
          _
        // Predicated region
        $region25: #{tpu_custom_call.1} parent=11 // pred_check
          %p197 = pneg %p126
        $region26: #{tpu_custom_call.1} parent=11 // pred_check_branch
          %199 = sbr.rel (%p197) target = $region28
        $region27: #{tpu_custom_call.1} parent=11 // pred_region
          %s201 = ssub.s32 2048, 2048
          %202 = vsyncadd [#allocation3], %s201
          %s203 = sshll.u32 [#allocation2], 4
          %s204 = int_to_ptr.vmem [resolvable:$true] %s203
          %209 = dma.hbm_to_vmem [thread:$0]  %s4, 2048, %s204, [#allocation3], 128, 128, 8
        $region28: #{tpu_custom_call.1} parent=11 // pred_fallthru
          _
        // Predicated region
        $region29: #{tpu_custom_call.1} parent=11 // pred_check
          %p210 = pneg %p147
        $region30: #{tpu_custom_call.1} parent=11 // pred_check_branch
          %212 = sbr.rel (%p210) target = $region32
        $region31: #{tpu_custom_call.1} parent=11 // pred_region
          _
        $region32: #{tpu_custom_call.1} parent=11 // pred_fallthru
          _
      $region12: #{tpu_custom_call.1} parent=5 // pred_fallthru
        _
      %p213 = scmp.lt.s32.totalorder %s16, 2
      // Predicated region
      $region33: #{tpu_custom_call.1} parent=5 // pred_check
        %p214 = pneg %p213
      $region34: #{tpu_custom_call.1} parent=5 // pred_check_branch
        %216 = sbr.rel (%p214) target = $region36
      $region35: #{tpu_custom_call.1} parent=5 // pred_region
        // Predicated region
        $region37: #{tpu_custom_call.1} parent=35 // pred_check
          %p217 = pneg %p36
        $region38: #{tpu_custom_call.1} parent=35 // pred_check_branch
          %219 = sbr.rel (%p217) target = $region40
        $region39: #{tpu_custom_call.1} parent=35 // pred_region
          %p220 = scmp.lt.s32.totalorder %s16, 1
          %s221 = scalar_select %p220, %s16, 1
          %s222 = smul.addr %s221, 8
          %s223 = scalar_lea.vmem %s0, %s222
        $region40: #{tpu_custom_call.1} parent=35 // pred_fallthru
          _
      $region36: #{tpu_custom_call.1} parent=5 // pred_fallthru
        _
      %p224 = scmp.le.s32.totalorder 1, %s16
      %p225 = scmp.lt.s32.totalorder %s16, 3
      %p226 = pnand %p224, %p225
      %p227 = pneg %p226
      // Predicated region
      $region41: #{tpu_custom_call.1} parent=5 // pred_check
        _
      $region42: #{tpu_custom_call.1} parent=5 // pred_check_branch
        %229 = sbr.rel (%p226) target = $region44
      $region43: #{tpu_custom_call.1} parent=5 // pred_region
        %s230 = ssub.s32 %s16, 1
        // Predicated region
        $region45: #{tpu_custom_call.1} parent=43 // pred_check
          %p231 = pneg %p126
        $region46: #{tpu_custom_call.1} parent=43 // pred_check_branch
          %233 = sbr.rel (%p231) target = $region48
        $region47: #{tpu_custom_call.1} parent=43 // pred_region
          %234 = dma.done [#allocation3], 2048
        $region48: #{tpu_custom_call.1} parent=43 // pred_fallthru
          _
        %p235 = scmp.lt.s32.totalorder %s21, 1
        %s236 = scalar_select %p235, %s21, 1
        %s237 = smul.addr %s236, 8
        %s238 = scalar_lea.vmem %s0, %s237
        %p239 = pneg %p42
        %p240 = pneg %p39
        %p241 = pneg %p63
        %p242 = pneg %p60
        %p243 = pneg %p84
        %p244 = pneg %p81
        %p245 = pneg %p105
        %p246 = pneg %p102
        %p247 = pneg %p126
        %p248 = pneg %p123
        %p249 = pneg %p147
        %p250 = pneg %p144
        %p251 = pneg %p173
        %p252 = pneg %p170
        %s253 = sand.u32 %s160, 1
        %s254 = scalar_lea.sflag [#allocation4], %s253
        %s255 = sand.u32 %s160, 1
        %s256 = smul.addr %s255, 8
        %s257 = scalar_lea.vmem [#allocation5], %s256
        %p258 = scmp.lt.s32.totalorder %s21, 1
        %s259 = scalar_select %p258, %s21, 1
        %s260 = smul.addr %s259, 8
        %s261 = scalar_lea.vmem %s0, %s260
        %v262 = vld [vmem:[%s261] sm:$0xff]
        %v263 = vld [vmem:[%s1] sm:$0xff]
        %v264 = vld [vmem:[%s1 + $0x8] sm:$0xff]
        %v265 = vld [vmem:[%s1 + $0x10] sm:$0xff]
        %v266 = vld [vmem:[%s1 + $0x18] sm:$0xff]
        %v267 = vld [vmem:[%s1 + $0x20] sm:$0xff]
        %v268 = vld [vmem:[%s1 + $0x28] sm:$0xff]
        %v269 = vld [vmem:[%s1 + $0x30] sm:$0xff]
        %v270 = vld [vmem:[%s1 + $0x38] sm:$0xff]
        %v271 = vlaneseq
        %v272 = vand.u32 %v271, 127
        %273 = vset.pattern.permute.xlu0 0
        %274 = vperm.xlu0 %273, %v262
        %v275 = vpop.permute.xlu0 %274
        %vm276 = vcmp.eq.s32.totalorder %v272, %v275
        %v277 = vsel %vm276, 1, 0
        %v278 = vcvt.s32.f32 %v277
        %vm279 = vcmask 523264
        %v281 = vsel %vm279, %v278, 0
        %283 = vmatprep.subr.mxu0 0.0
        %284 = vmatpush1.msra.mxu0 %v263
        %285 = vmatprep.subr.mxu0 0.0
        %286 = vmatpush1.msra.mxu0 %v264
        %287 = vmatprep.subr.mxu0 0.0
        %288 = vmatpush1.msra.mxu0 %v265
        %289 = vmatprep.subr.mxu0 0.0
        %290 = vmatpush1.msra.mxu0 %v266
        %291 = vmatprep.subr.mxu0 0.0
        %292 = vmatpush1.msra.mxu0 %v267
        %293 = vmatprep.subr.mxu0 0.0
        %294 = vmatpush1.msra.mxu0 %v268
        %295 = vmatprep.subr.mxu0 0.0
        %296 = vmatpush1.msra.mxu0 %v269
        %297 = vmatprep.subr.mxu0 0.0
        %298 = vmatpush1.msra.mxu0 %v270
        %299 = vmatprep.subr.mxu0 0.0
        %300 = vmatpush1.msra.mxu0 0.0
        %301 = vmatprep.subr.mxu0 0.0
        %302 = vmatpush1.msra.mxu0 0.0
        %303 = vmatprep.subr.mxu0 0.0
        %304 = vmatpush1.msra.mxu0 0.0
        %305 = vmatprep.subr.mxu0 0.0
        %306 = vmatpush1.msra.mxu0 0.0
        %307 = vmatprep.subr.mxu0 0.0
        %308 = vmatpush1.msra.mxu0 0.0
        %309 = vmatprep.subr.mxu0 0.0
        %310 = vmatpush1.msra.mxu0 0.0
        %311 = vmatprep.subr.mxu0 0.0
        %312 = vmatpush1.msra.mxu0 0.0
        %313 = vmatprep.subr.mxu0 0.0
        %314 = vmatpush1.msra.mxu0 0.0
        %315 = vmatprep.subr.mxu0 0.0
        %316 = vmatpush1.msra.mxu0 0.0
        %317 = vmatprep.subr.mxu0 0.0
        %318 = vmatpush1.msra.mxu0 0.0
        %319 = vmatprep.subr.mxu0 0.0
        %320 = vmatpush1.msra.mxu0 0.0
        %321 = vmatprep.subr.mxu0 0.0
        %322 = vmatpush1.msra.mxu0 0.0
        %323 = vmatprep.subr.mxu0 0.0
        %324 = vmatpush1.msra.mxu0 0.0
        %325 = vmatprep.subr.mxu0 0.0
        %326 = vmatpush1.msra.mxu0 0.0
        %327 = vmatprep.subr.mxu0 0.0
        %328 = vmatpush1.msra.mxu0 0.0
        %329 = vmatprep.subr.mxu0 0.0
        %330 = vmatpush1.msra.mxu0 0.0
        %331 = vmatprep.subr.mxu0 0.0
        %332 = vmatpush1.msra.mxu0 0.0
        %333 = vmatprep.subr.mxu0 0.0
        %334 = vmatpush1.msra.mxu0 0.0
        %335 = vmatprep.subr.mxu0 0.0
        %336 = vmatpush1.msra.mxu0 0.0
        %337 = vmatprep.subr.mxu0 0.0
        %338 = vmatpush1.msra.mxu0 0.0
        %339 = vmatprep.subr.mxu0 0.0
        %340 = vmatpush1.msra.mxu0 0.0
        %341 = vmatprep.subr.mxu0 0.0
        %342 = vmatpush1.msra.mxu0 0.0
        %343 = vmatprep.subr.mxu0 0.0
        %344 = vmatpush1.msra.mxu0 0.0
        %345 = vmatprep.subr.mxu0 0.0
        %346 = vmatpush1.msra.mxu0 0.0
        %347 = vmatprep.mubr.f32.mxu0 0.0
        %348 = vmatmul.mubr.f32.gmra.mrb[0].mxu0 %v281
        %v349 = vpop.f32.mrb[0].mxu0
        %v350 = vadd.f32 0.0, %v349
        %v351 = vpop.f32.mrb[0].mxu0
        %352 = vdwg.mxu0
        %v353 = vld [vmem:[%s2] sm:$0xff]
        %v354 = vld [vmem:[%s2 + $0x8] sm:$0xff]
        %355 = vset.pattern.permute.xlu0 1
        %356 = vperm.xlu0 %355, %v262
        %v357 = vpop.permute.xlu0 %356
        %vm358 = vcmp.eq.s32.totalorder %v272, %v357
        %v359 = vsel %vm358, 1, 0
        %v360 = vcvt.s32.f32 %v359
        %v362 = vsel %vm279, %v360, 0
        %364 = vmatprep.subr.mxu0 0.0
        %365 = vmatpush1.msra.mxu0 %v263
        %366 = vmatprep.subr.mxu0 0.0
        %367 = vmatpush1.msra.mxu0 %v264
        %368 = vmatprep.subr.mxu0 0.0
        %369 = vmatpush1.msra.mxu0 %v265
        %370 = vmatprep.subr.mxu0 0.0
        %371 = vmatpush1.msra.mxu0 %v266
        %372 = vmatprep.subr.mxu0 0.0
        %373 = vmatpush1.msra.mxu0 %v267
        %374 = vmatprep.subr.mxu0 0.0
        %375 = vmatpush1.msra.mxu0 %v268
        %376 = vmatprep.subr.mxu0 0.0
        %377 = vmatpush1.msra.mxu0 %v269
        %378 = vmatprep.subr.mxu0 0.0
        %379 = vmatpush1.msra.mxu0 %v270
        %380 = vmatprep.subr.mxu0 0.0
        %381 = vmatpush1.msra.mxu0 0.0
        %382 = vmatprep.subr.mxu0 0.0
        %383 = vmatpush1.msra.mxu0 0.0
        %384 = vmatprep.subr.mxu0 0.0
        %385 = vmatpush1.msra.mxu0 0.0
        %386 = vmatprep.subr.mxu0 0.0
        %387 = vmatpush1.msra.mxu0 0.0
        %388 = vmatprep.subr.mxu0 0.0
        %389 = vmatpush1.msra.mxu0 0.0
        %390 = vmatprep.subr.mxu0 0.0
        %391 = vmatpush1.msra.mxu0 0.0
        %392 = vmatprep.subr.mxu0 0.0
        %393 = vmatpush1.msra.mxu0 0.0
        %394 = vmatprep.subr.mxu0 0.0
        %395 = vmatpush1.msra.mxu0 0.0
        %396 = vmatprep.subr.mxu0 0.0
        %397 = vmatpush1.msra.mxu0 0.0
        %398 = vmatprep.subr.mxu0 0.0
        %399 = vmatpush1.msra.mxu0 0.0
        %400 = vmatprep.subr.mxu0 0.0
        %401 = vmatpush1.msra.mxu0 0.0
        %402 = vmatprep.subr.mxu0 0.0
        %403 = vmatpush1.msra.mxu0 0.0
        %404 = vmatprep.subr.mxu0 0.0
        %405 = vmatpush1.msra.mxu0 0.0
        %406 = vmatprep.subr.mxu0 0.0
        %407 = vmatpush1.msra.mxu0 0.0
        %408 = vmatprep.subr.mxu0 0.0
        %409 = vmatpush1.msra.mxu0 0.0
        %410 = vmatprep.subr.mxu0 0.0
        %411 = vmatpush1.msra.mxu0 0.0
        %412 = vmatprep.subr.mxu0 0.0
        %413 = vmatpush1.msra.mxu0 0.0
        %414 = vmatprep.subr.mxu0 0.0
        %415 = vmatpush1.msra.mxu0 0.0
        %416 = vmatprep.subr.mxu0 0.0
        %417 = vmatpush1.msra.mxu0 0.0
        %418 = vmatprep.subr.mxu0 0.0
        %419 = vmatpush1.msra.mxu0 0.0
        %420 = vmatprep.subr.mxu0 0.0
        %421 = vmatpush1.msra.mxu0 0.0
        %422 = vmatprep.subr.mxu0 0.0
        %423 = vmatpush1.msra.mxu0 0.0
        %424 = vmatprep.subr.mxu0 0.0
        %425 = vmatpush1.msra.mxu0 0.0
        %426 = vmatprep.subr.mxu0 0.0
        %427 = vmatpush1.msra.mxu0 0.0
        %428 = vmatprep.mubr.f32.mxu0 0.0
        %429 = vmatmul.mubr.f32.gmra.mrb[0].mxu0 %v362
        %v430 = vpop.f32.mrb[0].mxu0
        %v431 = vadd.f32 0.0, %v430
        %v432 = vpop.f32.mrb[0].mxu0
        %433 = vdwg.mxu0
        %v434 = vld [vmem:[%s2 + $0x10] sm:$0xff]
        %v435 = vld [vmem:[%s2 + $0x18] sm:$0xff]
        %vm436 = vcmask 64512
        %v438 = vsel %vm436, %v431, 0
        %440 = vmatprep.subr.mxu0 %v435
        %441 = vmatpush1.msra.mxu0 %v434
        %442 = vmatprep.subr.mxu0 0.0
        %443 = vmatpush1.msra.mxu0 0.0
        %444 = vmatprep.subr.mxu0 0.0
        %445 = vmatpush1.msra.mxu0 0.0
        %446 = vmatprep.subr.mxu0 0.0
        %447 = vmatpush1.msra.mxu0 0.0
        %448 = vmatprep.subr.mxu0 0.0
        %449 = vmatpush1.msra.mxu0 0.0
        %450 = vmatprep.subr.mxu0 0.0
        %451 = vmatpush1.msra.mxu0 0.0
        %452 = vmatprep.subr.mxu0 0.0
        %453 = vmatpush1.msra.mxu0 0.0
        %454 = vmatprep.subr.mxu0 0.0
        %455 = vmatpush1.msra.mxu0 0.0
        %456 = vmatprep.subr.mxu0 0.0
        %457 = vmatpush1.msra.mxu0 0.0
        %458 = vmatprep.subr.mxu0 0.0
        %459 = vmatpush1.msra.mxu0 0.0
        %460 = vmatprep.subr.mxu0 0.0
        %461 = vmatpush1.msra.mxu0 0.0
        %462 = vmatprep.subr.mxu0 0.0
        %463 = vmatpush1.msra.mxu0 0.0
        %464 = vmatprep.subr.mxu0 0.0
        %465 = vmatpush1.msra.mxu0 0.0
        %466 = vmatprep.subr.mxu0 0.0
        %467 = vmatpush1.msra.mxu0 0.0
        %468 = vmatprep.subr.mxu0 0.0
        %469 = vmatpush1.msra.mxu0 0.0
        %470 = vmatprep.subr.mxu0 0.0
        %471 = vmatpush1.msra.mxu0 0.0
        %472 = vmatprep.subr.mxu0 0.0
        %473 = vmatpush1.msra.mxu0 0.0
        %474 = vmatprep.subr.mxu0 0.0
        %475 = vmatpush1.msra.mxu0 0.0
        %476 = vmatprep.subr.mxu0 0.0
        %477 = vmatpush1.msra.mxu0 0.0
        %478 = vmatprep.subr.mxu0 0.0
        %479 = vmatpush1.msra.mxu0 0.0
        %480 = vmatprep.subr.mxu0 0.0
        %481 = vmatpush1.msra.mxu0 0.0
        %482 = vmatprep.subr.mxu0 0.0
        %483 = vmatpush1.msra.mxu0 0.0
        %484 = vmatprep.subr.mxu0 0.0
        %485 = vmatpush1.msra.mxu0 0.0
        %486 = vmatprep.subr.mxu0 0.0
        %487 = vmatpush1.msra.mxu0 0.0
        %488 = vmatprep.subr.mxu0 0.0
        %489 = vmatpush1.msra.mxu0 0.0
        %490 = vmatprep.subr.mxu0 0.0
        %491 = vmatpush1.msra.mxu0 0.0
        %492 = vmatprep.subr.mxu0 0.0
        %493 = vmatpush1.msra.mxu0 0.0
        %494 = vmatprep.subr.mxu0 0.0
        %495 = vmatpush1.msra.mxu0 0.0
        %496 = vmatprep.subr.mxu0 0.0
        %497 = vmatpush1.msra.mxu0 0.0
        %498 = vmatprep.subr.mxu0 0.0
        %499 = vmatpush1.msra.mxu0 0.0
        %500 = vmatprep.subr.mxu0 0.0
        %501 = vmatpush1.msra.mxu0 0.0
        %502 = vmatprep.subr.mxu0 0.0
        %503 = vmatpush1.msra.mxu0 0.0
        %504 = vmatprep.mubr.f32.mxu0 0.0
        %505 = vmatmul.mubr.f32.gmra.mrb[0].mxu0 %v438
        %v506 = vpop.f32.mrb[0].mxu0
        %v507 = vadd.f32 0.0, %v506
        %v508 = vpop.f32.mrb[0].mxu0
        %v509 = vadd.f32 0.0, %v508
        %510 = vdwg.mxu0
        %v512 = vsel %vm436, %v350, 0
        %514 = vmatprep.subr.mxu0 %v354
        %515 = vmatpush1.msra.mxu0 %v353
        %516 = vmatprep.subr.mxu0 0.0
        %517 = vmatpush1.msra.mxu0 0.0
        %518 = vmatprep.subr.mxu0 0.0
        %519 = vmatpush1.msra.mxu0 0.0
        %520 = vmatprep.subr.mxu0 0.0
        %521 = vmatpush1.msra.mxu0 0.0
        %522 = vmatprep.subr.mxu0 0.0
        %523 = vmatpush1.msra.mxu0 0.0
        %524 = vmatprep.subr.mxu0 0.0
        %525 = vmatpush1.msra.mxu0 0.0
        %526 = vmatprep.subr.mxu0 0.0
        %527 = vmatpush1.msra.mxu0 0.0
        %528 = vmatprep.subr.mxu0 0.0
        %529 = vmatpush1.msra.mxu0 0.0
        %530 = vmatprep.subr.mxu0 0.0
        %531 = vmatpush1.msra.mxu0 0.0
        %532 = vmatprep.subr.mxu0 0.0
        %533 = vmatpush1.msra.mxu0 0.0
        %534 = vmatprep.subr.mxu0 0.0
        %535 = vmatpush1.msra.mxu0 0.0
        %536 = vmatprep.subr.mxu0 0.0
        %537 = vmatpush1.msra.mxu0 0.0
        %538 = vmatprep.subr.mxu0 0.0
        %539 = vmatpush1.msra.mxu0 0.0
        %540 = vmatprep.subr.mxu0 0.0
        %541 = vmatpush1.msra.mxu0 0.0
        %542 = vmatprep.subr.mxu0 0.0
        %543 = vmatpush1.msra.mxu0 0.0
        %544 = vmatprep.subr.mxu0 0.0
        %545 = vmatpush1.msra.mxu0 0.0
        %546 = vmatprep.subr.mxu0 0.0
        %547 = vmatpush1.msra.mxu0 0.0
        %548 = vmatprep.subr.mxu0 0.0
        %549 = vmatpush1.msra.mxu0 0.0
        %550 = vmatprep.subr.mxu0 0.0
        %551 = vmatpush1.msra.mxu0 0.0
        %552 = vmatprep.subr.mxu0 0.0
        %553 = vmatpush1.msra.mxu0 0.0
        %554 = vmatprep.subr.mxu0 0.0
        %555 = vmatpush1.msra.mxu0 0.0
        %556 = vmatprep.subr.mxu0 0.0
        %557 = vmatpush1.msra.mxu0 0.0
        %558 = vmatprep.subr.mxu0 0.0
        %559 = vmatpush1.msra.mxu0 0.0
        %560 = vmatprep.subr.mxu0 0.0
        %561 = vmatpush1.msra.mxu0 0.0
        %562 = vmatprep.subr.mxu0 0.0
        %563 = vmatpush1.msra.mxu0 0.0
        %564 = vmatprep.subr.mxu0 0.0
        %565 = vmatpush1.msra.mxu0 0.0
        %566 = vmatprep.subr.mxu0 0.0
        %567 = vmatpush1.msra.mxu0 0.0
        %568 = vmatprep.subr.mxu0 0.0
        %569 = vmatpush1.msra.mxu0 0.0
        %570 = vmatprep.subr.mxu0 0.0
        %571 = vmatpush1.msra.mxu0 0.0
        %572 = vmatprep.subr.mxu0 0.0
        %573 = vmatpush1.msra.mxu0 0.0
        %574 = vmatprep.subr.mxu0 0.0
        %575 = vmatpush1.msra.mxu0 0.0
        %576 = vmatprep.subr.mxu0 0.0
        %577 = vmatpush1.msra.mxu0 0.0
        %578 = vmatprep.mubr.f32.mxu0 0.0
        %579 = vmatmul.mubr.f32.gmra.mrb[0].mxu0 %v512
        %v580 = vpop.f32.mrb[0].mxu0
        %v581 = vadd.f32 %v507, %v580
        %v582 = vpop.f32.mrb[0].mxu0
        %v583 = vadd.f32 %v509, %v582
        %584 = vdwg.mxu0
        %585 = vset.pattern.permute.xlu0 2
        %586 = vperm.xlu0 %585, %v262
        %v587 = vpop.permute.xlu0 %586
        %vm588 = vcmp.eq.s32.totalorder %v272, %v587
        %v589 = vsel %vm588, 1, 0
        %v590 = vcvt.s32.f32 %v589
        %v592 = vsel %vm279, %v590, 0
        %594 = vmatprep.subr.mxu0 0.0
        %595 = vmatpush1.msra.mxu0 %v263
        %596 = vmatprep.subr.mxu0 0.0
        %597 = vmatpush1.msra.mxu0 %v264
        %598 = vmatprep.subr.mxu0 0.0
        %599 = vmatpush1.msra.mxu0 %v265
        %600 = vmatprep.subr.mxu0 0.0
        %601 = vmatpush1.msra.mxu0 %v266
        %602 = vmatprep.subr.mxu0 0.0
        %603 = vmatpush1.msra.mxu0 %v267
        %604 = vmatprep.subr.mxu0 0.0
        %605 = vmatpush1.msra.mxu0 %v268
        %606 = vmatprep.subr.mxu0 0.0
        %607 = vmatpush1.msra.mxu0 %v269
        %608 = vmatprep.subr.mxu0 0.0
        %609 = vmatpush1.msra.mxu0 %v270
        %610 = vmatprep.subr.mxu0 0.0
        %611 = vmatpush1.msra.mxu0 0.0
        %612 = vmatprep.subr.mxu0 0.0
        %613 = vmatpush1.msra.mxu0 0.0
        %614 = vmatprep.subr.mxu0 0.0
        %615 = vmatpush1.msra.mxu0 0.0
        %616 = vmatprep.subr.mxu0 0.0
        %617 = vmatpush1.msra.mxu0 0.0
        %618 = vmatprep.subr.mxu0 0.0
        %619 = vmatpush1.msra.mxu0 0.0
        %620 = vmatprep.subr.mxu0 0.0
        %621 = vmatpush1.msra.mxu0 0.0
        %622 = vmatprep.subr.mxu0 0.0
        %623 = vmatpush1.msra.mxu0 0.0
        %624 = vmatprep.subr.mxu0 0.0
        %625 = vmatpush1.msra.mxu0 0.0
        %626 = vmatprep.subr.mxu0 0.0
        %627 = vmatpush1.msra.mxu0 0.0
        %628 = vmatprep.subr.mxu0 0.0
        %629 = vmatpush1.msra.mxu0 0.0
        %630 = vmatprep.subr.mxu0 0.0
        %631 = vmatpush1.msra.mxu0 0.0
        %632 = vmatprep.subr.mxu0 0.0
        %633 = vmatpush1.msra.mxu0 0.0
        %634 = vmatprep.subr.mxu0 0.0
        %635 = vmatpush1.msra.mxu0 0.0
        %636 = vmatprep.subr.mxu0 0.0
        %637 = vmatpush1.msra.mxu0 0.0
        %638 = vmatprep.subr.mxu0 0.0
        %639 = vmatpush1.msra.mxu0 0.0
        %640 = vmatprep.subr.mxu0 0.0
        %641 = vmatpush1.msra.mxu0 0.0
        %642 = vmatprep.subr.mxu0 0.0
        %643 = vmatpush1.msra.mxu0 0.0
        %644 = vmatprep.subr.mxu0 0.0
        %645 = vmatpush1.msra.mxu0 0.0
        %646 = vmatprep.subr.mxu0 0.0
        %647 = vmatpush1.msra.mxu0 0.0
        %648 = vmatprep.subr.mxu0 0.0
        %649 = vmatpush1.msra.mxu0 0.0
        %650 = vmatprep.subr.mxu0 0.0
        %651 = vmatpush1.msra.mxu0 0.0
        %652 = vmatprep.subr.mxu0 0.0
        %653 = vmatpush1.msra.mxu0 0.0
        %654 = vmatprep.subr.mxu0 0.0
        %655 = vmatpush1.msra.mxu0 0.0
        %656 = vmatprep.subr.mxu0 0.0
        %657 = vmatpush1.msra.mxu0 0.0
        %658 = vmatprep.mubr.f32.mxu0 0.0
        %659 = vmatmul.mubr.f32.gmra.mrb[0].mxu0 %v592
        %v660 = vpop.f32.mrb[0].mxu0
        %v661 = vadd.f32 0.0, %v660
        %v662 = vpop.f32.mrb[0].mxu0
        %663 = vdwg.mxu0
        %v664 = vld [vmem:[%s2 + $0x20] sm:$0xff]
        %v665 = vld [vmem:[%s2 + $0x28] sm:$0xff]
        %v667 = vsel %vm436, %v661, 0
        %669 = vmatprep.subr.mxu0 %v665
        %670 = vmatpush1.msra.mxu0 %v664
        %671 = vmatprep.subr.mxu0 0.0
        %672 = vmatpush1.msra.mxu0 0.0
        %673 = vmatprep.subr.mxu0 0.0
        %674 = vmatpush1.msra.mxu0 0.0
        %675 = vmatprep.subr.mxu0 0.0
        %676 = vmatpush1.msra.mxu0 0.0
        %677 = vmatprep.subr.mxu0 0.0
        %678 = vmatpush1.msra.mxu0 0.0
        %679 = vmatprep.subr.mxu0 0.0
        %680 = vmatpush1.msra.mxu0 0.0
        %681 = vmatprep.subr.mxu0 0.0
        %682 = vmatpush1.msra.mxu0 0.0
        %683 = vmatprep.subr.mxu0 0.0
        %684 = vmatpush1.msra.mxu0 0.0
        %685 = vmatprep.subr.mxu0 0.0
        %686 = vmatpush1.msra.mxu0 0.0
        %687 = vmatprep.subr.mxu0 0.0
        %688 = vmatpush1.msra.mxu0 0.0
        %689 = vmatprep.subr.mxu0 0.0
        %690 = vmatpush1.msra.mxu0 0.0
        %691 = vmatprep.subr.mxu0 0.0
        %692 = vmatpush1.msra.mxu0 0.0
        %693 = vmatprep.subr.mxu0 0.0
        %694 = vmatpush1.msra.mxu0 0.0
        %695 = vmatprep.subr.mxu0 0.0
        %696 = vmatpush1.msra.mxu0 0.0
        %697 = vmatprep.subr.mxu0 0.0
        %698 = vmatpush1.msra.mxu0 0.0
        %699 = vmatprep.subr.mxu0 0.0
        %700 = vmatpush1.msra.mxu0 0.0
        %701 = vmatprep.subr.mxu0 0.0
        %702 = vmatpush1.msra.mxu0 0.0
        %703 = vmatprep.subr.mxu0 0.0
        %704 = vmatpush1.msra.mxu0 0.0
        %705 = vmatprep.subr.mxu0 0.0
        %706 = vmatpush1.msra.mxu0 0.0
        %707 = vmatprep.subr.mxu0 0.0
        %708 = vmatpush1.msra.mxu0 0.0
        %709 = vmatprep.subr.mxu0 0.0
        %710 = vmatpush1.msra.mxu0 0.0
        %711 = vmatprep.subr.mxu0 0.0
        %712 = vmatpush1.msra.mxu0 0.0
        %713 = vmatprep.subr.mxu0 0.0
        %714 = vmatpush1.msra.mxu0 0.0
        %715 = vmatprep.subr.mxu0 0.0
        %716 = vmatpush1.msra.mxu0 0.0
        %717 = vmatprep.subr.mxu0 0.0
        %718 = vmatpush1.msra.mxu0 0.0
        %719 = vmatprep.subr.mxu0 0.0
        %720 = vmatpush1.msra.mxu0 0.0
        %721 = vmatprep.subr.mxu0 0.0
        %722 = vmatpush1.msra.mxu0 0.0
        %723 = vmatprep.subr.mxu0 0.0
        %724 = vmatpush1.msra.mxu0 0.0
        %725 = vmatprep.subr.mxu0 0.0
        %726 = vmatpush1.msra.mxu0 0.0
        %727 = vmatprep.subr.mxu0 0.0
        %728 = vmatpush1.msra.mxu0 0.0
        %729 = vmatprep.subr.mxu0 0.0
        %730 = vmatpush1.msra.mxu0 0.0
        %731 = vmatprep.subr.mxu0 0.0
        %732 = vmatpush1.msra.mxu0 0.0
        %733 = vmatprep.mubr.f32.mxu0 0.0
        %734 = vmatmul.mubr.f32.gmra.mrb[0].mxu0 %v667
        %v735 = vpop.f32.mrb[0].mxu0
        %v736 = vadd.f32 0.0, %v735
        %v737 = vpop.f32.mrb[0].mxu0
        %v738 = vadd.f32 0.0, %v737
        %739 = vdwg.mxu0
        %v740 = vadd.f32 %v581, %v736
        %v741 = vadd.f32 %v583, %v738
        %742 = vset.pattern.permute.xlu0 3
        %743 = vperm.xlu0 %742, %v262
        %v744 = vpop.permute.xlu0 %743
        %vm745 = vcmp.eq.s32.totalorder %v272, %v744
        %v746 = vsel %vm745, 1, 0
        %v747 = vcvt.s32.f32 %v746
        %v749 = vsel %vm279, %v747, 0
        %751 = vmatprep.subr.mxu0 0.0
        %752 = vmatpush1.msra.mxu0 %v263
        %753 = vmatprep.subr.mxu0 0.0
        %754 = vmatpush1.msra.mxu0 %v264
        %755 = vmatprep.subr.mxu0 0.0
        %756 = vmatpush1.msra.mxu0 %v265
        %757 = vmatprep.subr.mxu0 0.0
        %758 = vmatpush1.msra.mxu0 %v266
        %759 = vmatprep.subr.mxu0 0.0
        %760 = vmatpush1.msra.mxu0 %v267
        %761 = vmatprep.subr.mxu0 0.0
        %762 = vmatpush1.msra.mxu0 %v268
        %763 = vmatprep.subr.mxu0 0.0
        %764 = vmatpush1.msra.mxu0 %v269
        %765 = vmatprep.subr.mxu0 0.0
        %766 = vmatpush1.msra.mxu0 %v270
        %767 = vmatprep.subr.mxu0 0.0
        %768 = vmatpush1.msra.mxu0 0.0
        %769 = vmatprep.subr.mxu0 0.0
        %770 = vmatpush1.msra.mxu0 0.0
        %771 = vmatprep.subr.mxu0 0.0
        %772 = vmatpush1.msra.mxu0 0.0
        %773 = vmatprep.subr.mxu0 0.0
        %774 = vmatpush1.msra.mxu0 0.0
        %775 = vmatprep.subr.mxu0 0.0
        %776 = vmatpush1.msra.mxu0 0.0
        %777 = vmatprep.subr.mxu0 0.0
        %778 = vmatpush1.msra.mxu0 0.0
        %779 = vmatprep.subr.mxu0 0.0
        %780 = vmatpush1.msra.mxu0 0.0
        %781 = vmatprep.subr.mxu0 0.0
        %782 = vmatpush1.msra.mxu0 0.0
        %783 = vmatprep.subr.mxu0 0.0
        %784 = vmatpush1.msra.mxu0 0.0
        %785 = vmatprep.subr.mxu0 0.0
        %786 = vmatpush1.msra.mxu0 0.0
        %787 = vmatprep.subr.mxu0 0.0
        %788 = vmatpush1.msra.mxu0 0.0
        %789 = vmatprep.subr.mxu0 0.0
        %790 = vmatpush1.msra.mxu0 0.0
        %791 = vmatprep.subr.mxu0 0.0
        %792 = vmatpush1.msra.mxu0 0.0
        %793 = vmatprep.subr.mxu0 0.0
        %794 = vmatpush1.msra.mxu0 0.0
        %795 = vmatprep.subr.mxu0 0.0
        %796 = vmatpush1.msra.mxu0 0.0
        %797 = vmatprep.subr.mxu0 0.0
        %798 = vmatpush1.msra.mxu0 0.0
        %799 = vmatprep.subr.mxu0 0.0
        %800 = vmatpush1.msra.mxu0 0.0
        %801 = vmatprep.subr.mxu0 0.0
        %802 = vmatpush1.msra.mxu0 0.0
        %803 = vmatprep.subr.mxu0 0.0
        %804 = vmatpush1.msra.mxu0 0.0
        %805 = vmatprep.subr.mxu0 0.0
        %806 = vmatpush1.msra.mxu0 0.0
        %807 = vmatprep.subr.mxu0 0.0
        %808 = vmatpush1.msra.mxu0 0.0
        %809 = vmatprep.subr.mxu0 0.0
        %810 = vmatpush1.msra.mxu0 0.0
        %811 = vmatprep.subr.mxu0 0.0
        %812 = vmatpush1.msra.mxu0 0.0
        %813 = vmatprep.subr.mxu0 0.0
        %814 = vmatpush1.msra.mxu0 0.0
        %815 = vmatprep.mubr.f32.mxu0 0.0
        %816 = vmatmul.mubr.f32.gmra.mrb[0].mxu0 %v749
        %v817 = vpop.f32.mrb[0].mxu0
        %v818 = vadd.f32 0.0, %v817
        %v819 = vpop.f32.mrb[0].mxu0
        %820 = vdwg.mxu0
        %v821 = vld [vmem:[%s2 + $0x30] sm:$0xff]
        %v822 = vld [vmem:[%s2 + $0x38] sm:$0xff]
        %v824 = vsel %vm436, %v818, 0
        %826 = vmatprep.subr.mxu0 %v822
        %827 = vmatpush1.msra.mxu0 %v821
        %828 = vmatprep.subr.mxu0 0.0
        %829 = vmatpush1.msra.mxu0 0.0
        %830 = vmatprep.subr.mxu0 0.0
        %831 = vmatpush1.msra.mxu0 0.0
        %832 = vmatprep.subr.mxu0 0.0
        %833 = vmatpush1.msra.mxu0 0.0
        %834 = vmatprep.subr.mxu0 0.0
        %835 = vmatpush1.msra.mxu0 0.0
        %836 = vmatprep.subr.mxu0 0.0
        %837 = vmatpush1.msra.mxu0 0.0
        %838 = vmatprep.subr.mxu0 0.0
        %839 = vmatpush1.msra.mxu0 0.0
        %840 = vmatprep.subr.mxu0 0.0
        %841 = vmatpush1.msra.mxu0 0.0
        %842 = vmatprep.subr.mxu0 0.0
        %843 = vmatpush1.msra.mxu0 0.0
        %844 = vmatprep.subr.mxu0 0.0
        %845 = vmatpush1.msra.mxu0 0.0
        %846 = vmatprep.subr.mxu0 0.0
        %847 = vmatpush1.msra.mxu0 0.0
        %848 = vmatprep.subr.mxu0 0.0
        %849 = vmatpush1.msra.mxu0 0.0
        %850 = vmatprep.subr.mxu0 0.0
        %851 = vmatpush1.msra.mxu0 0.0
        %852 = vmatprep.subr.mxu0 0.0
        %853 = vmatpush1.msra.mxu0 0.0
        %854 = vmatprep.subr.mxu0 0.0
        %855 = vmatpush1.msra.mxu0 0.0
        %856 = vmatprep.subr.mxu0 0.0
        %857 = vmatpush1.msra.mxu0 0.0
        %858 = vmatprep.subr.mxu0 0.0
        %859 = vmatpush1.msra.mxu0 0.0
        %860 = vmatprep.subr.mxu0 0.0
        %861 = vmatpush1.msra.mxu0 0.0
        %862 = vmatprep.subr.mxu0 0.0
        %863 = vmatpush1.msra.mxu0 0.0
        %864 = vmatprep.subr.mxu0 0.0
        %865 = vmatpush1.msra.mxu0 0.0
        %866 = vmatprep.subr.mxu0 0.0
        %867 = vmatpush1.msra.mxu0 0.0
        %868 = vmatprep.subr.mxu0 0.0
        %869 = vmatpush1.msra.mxu0 0.0
        %870 = vmatprep.subr.mxu0 0.0
        %871 = vmatpush1.msra.mxu0 0.0
        %872 = vmatprep.subr.mxu0 0.0
        %873 = vmatpush1.msra.mxu0 0.0
        %874 = vmatprep.subr.mxu0 0.0
        %875 = vmatpush1.msra.mxu0 0.0
        %876 = vmatprep.subr.mxu0 0.0
        %877 = vmatpush1.msra.mxu0 0.0
        %878 = vmatprep.subr.mxu0 0.0
        %879 = vmatpush1.msra.mxu0 0.0
        %880 = vmatprep.subr.mxu0 0.0
        %881 = vmatpush1.msra.mxu0 0.0
        %882 = vmatprep.subr.mxu0 0.0
        %883 = vmatpush1.msra.mxu0 0.0
        %884 = vmatprep.subr.mxu0 0.0
        %885 = vmatpush1.msra.mxu0 0.0
        %886 = vmatprep.subr.mxu0 0.0
        %887 = vmatpush1.msra.mxu0 0.0
        %888 = vmatprep.subr.mxu0 0.0
        %889 = vmatpush1.msra.mxu0 0.0
        %890 = vmatprep.mubr.f32.mxu0 0.0
        %891 = vmatmul.mubr.f32.gmra.mrb[0].mxu0 %v824
        %v892 = vpop.f32.mrb[0].mxu0
        %v893 = vadd.f32 0.0, %v892
        %v894 = vpop.f32.mrb[0].mxu0
        %v895 = vadd.f32 0.0, %v894
        %896 = vdwg.mxu0
        %v897 = vadd.f32 %v740, %v893
        %v898 = vadd.f32 %v741, %v895
        %v899 = vld [vmem:[%s3] sm:$0x1]
        %v901 = vlaneseq
        %v902 = vshrl.u32 %v901, 7
        %v903 = vsub.s32 0, %v902
        %v904 = vrot.slane %v899, %v903
        %v906 = vadd.f32 %v904, %v897
        %v907 = vtanh.pop %v906
        %v908 = vld [vmem:[%s5] sm:$0x1]
        %v910 = vlaneseq
        %v911 = vshrl.u32 %v910, 7
        %v912 = vsub.s32 0, %v911
        %v913 = vrot.slane %v908, %v912
        %v915 = vadd.f32 %v913, %v898
        %v916 = vld [vmem:[#allocation2] sm:$0xff]
        %v917 = vld [vmem:[#allocation2 + $0x8] sm:$0xff]
        %v918 = vld [vmem:[#allocation2 + $0x10] sm:$0xff]
        %v919 = vld [vmem:[#allocation2 + $0x18] sm:$0xff]
        %v920 = vld [vmem:[#allocation2 + $0x20] sm:$0xff]
        %v921 = vld [vmem:[#allocation2 + $0x28] sm:$0xff]
        %v922 = vld [vmem:[#allocation2 + $0x30] sm:$0xff]
        %v923 = vld [vmem:[#allocation2 + $0x38] sm:$0xff]
        %v924 = vld [vmem:[#allocation2 + $0x40] sm:$0xff]
        %v925 = vld [vmem:[#allocation2 + $0x48] sm:$0xff]
        %v926 = vld [vmem:[#allocation2 + $0x50] sm:$0xff]
        %v927 = vld [vmem:[#allocation2 + $0x58] sm:$0xff]
        %v928 = vld [vmem:[#allocation2 + $0x60] sm:$0xff]
        %v929 = vld [vmem:[#allocation2 + $0x68] sm:$0xff]
        %v930 = vld [vmem:[#allocation2 + $0x70] sm:$0xff]
        %v931 = vld [vmem:[#allocation2 + $0x78] sm:$0xff]
        %932 = vmatprep.subr.mxu0 0.0
        %933 = vmatpush1.msra.mxu0 %v916
        %934 = vmatprep.subr.mxu0 0.0
        %935 = vmatpush1.msra.mxu0 %v917
        %936 = vmatprep.subr.mxu0 0.0
        %937 = vmatpush1.msra.mxu0 %v918
        %938 = vmatprep.subr.mxu0 0.0
        %939 = vmatpush1.msra.mxu0 %v919
        %940 = vmatprep.subr.mxu0 0.0
        %941 = vmatpush1.msra.mxu0 %v920
        %942 = vmatprep.subr.mxu0 0.0
        %943 = vmatpush1.msra.mxu0 %v921
        %944 = vmatprep.subr.mxu0 0.0
        %945 = vmatpush1.msra.mxu0 %v922
        %946 = vmatprep.subr.mxu0 0.0
        %947 = vmatpush1.msra.mxu0 %v923
        %948 = vmatprep.subr.mxu0 0.0
        %949 = vmatpush1.msra.mxu0 %v924
        %950 = vmatprep.subr.mxu0 0.0
        %951 = vmatpush1.msra.mxu0 %v925
        %952 = vmatprep.subr.mxu0 0.0
        %953 = vmatpush1.msra.mxu0 %v926
        %954 = vmatprep.subr.mxu0 0.0
        %955 = vmatpush1.msra.mxu0 %v927
        %956 = vmatprep.subr.mxu0 0.0
        %957 = vmatpush1.msra.mxu0 %v928
        %958 = vmatprep.subr.mxu0 0.0
        %959 = vmatpush1.msra.mxu0 %v929
        %960 = vmatprep.subr.mxu0 0.0
        %961 = vmatpush1.msra.mxu0 %v930
        %962 = vmatprep.subr.mxu0 0.0
        %963 = vmatpush1.msra.mxu0 %v931
        %964 = vmatprep.subr.mxu0 0.0
        %965 = vmatpush1.msra.mxu0 0.0
        %966 = vmatprep.subr.mxu0 0.0
        %967 = vmatpush1.msra.mxu0 0.0
        %968 = vmatprep.subr.mxu0 0.0
        %969 = vmatpush1.msra.mxu0 0.0
        %970 = vmatprep.subr.mxu0 0.0
        %971 = vmatpush1.msra.mxu0 0.0
        %972 = vmatprep.subr.mxu0 0.0
        %973 = vmatpush1.msra.mxu0 0.0
        %974 = vmatprep.subr.mxu0 0.0
        %975 = vmatpush1.msra.mxu0 0.0
        %976 = vmatprep.subr.mxu0 0.0
        %977 = vmatpush1.msra.mxu0 0.0
        %978 = vmatprep.subr.mxu0 0.0
        %979 = vmatpush1.msra.mxu0 0.0
        %980 = vmatprep.subr.mxu0 0.0
        %981 = vmatpush1.msra.mxu0 0.0
        %982 = vmatprep.subr.mxu0 0.0
        %983 = vmatpush1.msra.mxu0 0.0
        %984 = vmatprep.subr.mxu0 0.0
        %985 = vmatpush1.msra.mxu0 0.0
        %986 = vmatprep.subr.mxu0 0.0
        %987 = vmatpush1.msra.mxu0 0.0
        %988 = vmatprep.subr.mxu0 0.0
        %989 = vmatpush1.msra.mxu0 0.0
        %990 = vmatprep.subr.mxu0 0.0
        %991 = vmatpush1.msra.mxu0 0.0
        %992 = vmatprep.subr.mxu0 0.0
        %993 = vmatpush1.msra.mxu0 0.0
        %994 = vmatprep.subr.mxu0 0.0
        %995 = vmatpush1.msra.mxu0 0.0
        %996 = vmatprep.mubr.f32.mxu0 0.0
        %997 = vmatmul.mubr.f32.gmra.mrb[0].mxu0 %v907
        %v998 = vpop.f32.mrb[0].mxu0
        %v999 = vadd.f32 0.0, %v998
        %v1000 = vpop.f32.mrb[0].mxu0
        %1001 = vdwg.mxu0
        %v1002 = vadd.f32 %v915, %v999
        %1003 = vst [vmem:[%s257] sm:$0xff] %v1002
        %s1004 = sand.u32 %s160, 1
        %s1005 = scalar_lea.sflag [#allocation4], %s1004
        %s1006 = sand.u32 %s160, 1
        %s1007 = smul.addr %s1006, 8
        %s1008 = scalar_lea.vmem [#allocation5], %s1007
        // Predicated region
        $region49: #{tpu_custom_call.1} parent=43 // pred_check
          %p1009 = pneg %p170
        $region50: #{tpu_custom_call.1} parent=43 // pred_check_branch
          %1011 = sbr.rel (%p1009) target = $region52
        $region51: #{tpu_custom_call.1} parent=43 // pred_region
          %s1013 = ssub.s32 128, 128
          %1014 = vsyncadd %s1005, %s1013
          %s1015 = smul.addr %s21, 128
          %s1016 = scalar_lea.hbm %s6, %s1015
          %s1018 = sshll.u32 %s1008, 4
          %s1019 = int_to_ptr.vmem [resolvable:$true] %s1018
          %1021 = dma.vmem_to_hbm [thread:$0]  %s1019, 128, %s1016, %s1005
        $region52: #{tpu_custom_call.1} parent=43 // pred_fallthru
          _
      $region44: #{tpu_custom_call.1} parent=5 // pred_fallthru
        _
      %p1022 = scmp.le.s32.totalorder 2, %s16
      // Predicated region
      $region53: #{tpu_custom_call.1} parent=5 // pred_check
        %p1023 = pneg %p1022
      $region54: #{tpu_custom_call.1} parent=5 // pred_check_branch
        %1025 = sbr.rel (%p1023) target = $region56
      $region55: #{tpu_custom_call.1} parent=5 // pred_region
        %s1026 = ssub.s32 %s16, 2
        // Predicated region
        $region57: #{tpu_custom_call.1} parent=55 // pred_check
          %p1027 = pneg %p176
        $region58: #{tpu_custom_call.1} parent=55 // pred_check_branch
          %1029 = sbr.rel (%p1027) target = $region60
        $region59: #{tpu_custom_call.1} parent=55 // pred_region
          %s1030 = sand.u32 %s161, 1
          %s1031 = scalar_lea.sflag [#allocation4], %s1030
          %s1032 = sand.u32 %s161, 1
          %s1033 = smul.addr %s1032, 8
          %s1034 = scalar_lea.vmem [#allocation5], %s1033
          %1035 = dma.done %s1031, 128
        $region60: #{tpu_custom_call.1} parent=55 // pred_fallthru
          _
      $region56: #{tpu_custom_call.1} parent=5 // pred_fallthru
        _
    $region6: #{tpu_custom_call.1} parent=1 // loop_footer
      %s20 = sadd.s32 1, %s16
    $region7: #{tpu_custom_call.1} parent=1 // loop_footer_branch
      %15 = sbr.rel target = $region3
    $region8: #{tpu_custom_call.1} parent=1 // loop_exit
      _
    %1036 = vsyncpa [#allocation3], 1
    %s1037 = scalar_lea.sflag [#allocation3], 1
    %1038 = vsyncpa %s1037, 1
    %1039 = vsyncpa [#allocation4], 1
    %s1040 = scalar_lea.sflag [#allocation4], 1
    %1041 = vsyncpa %s1040, 1

</llo_original>
